<compile_context>
chip_gen: v7x
topology: tpu7x:2x2x1
jax: 0.10.0
libtpu: 0.0.40
codegen_flags: <defaults>
</compile_context>

<pallas_src>
import functools

import numpy as np
import jax
import jax.numpy as jnp
from jax.experimental import pallas as pl
from jax.experimental.pallas import tpu as pltpu


_TM = 16           # batch rows per grid step (bf16 sublane pack = 16 rows/vreg)
_OUT_LANES = 128   # lane-dense output slab width == padded FC/score width


# ----------------------------- fused Pallas kernel -----------------------------

def _fused_conve_kernel(batch, h_ids, r_ids, t_ids,
                        ent_ref, rel_ref, w1_ref, b1_ref, w2_ref, b2_ref,
                        o_ref, x_scr, et_scr):
    """Whole ConvE-style forward (gather included) for the padded batch.

    h_ids/r_ids/t_ids : (B,)  int32  SMEM scalar-prefetch id vectors
    ent               : (NE, K)  f32   entity table   (VMEM resident)
    rel               : (NR, K)  f32   relation table (VMEM resident)
    w1                : (H*W, P*F) bf16  conv folded to dense (im2col absorbed)
    b1                : (1, P*F)   f32   conv bias tiled patch-major
    w2                : (P*F, 128) bf16  FC weight, zero-padded K=32 -> 128
    b2                : (1, 128)   f32   FC bias, zero-padded
    o                 : (M, 128)   f32   sigmoid(score) broadcast across lanes
    x_scr             : (M, H*W)   f32   scratch: stacked (h, r) rows
    et_scr            : (M, 128)   f32   scratch: tail embeddings, zero-padded
    """
    k = ent_ref.shape[1]

    # Padded rows stay exactly zero -> finite, deterministic tail rows.
    x_scr[...] = jnp.zeros_like(x_scr)
    et_scr[...] = jnp.zeros_like(et_scr)

    # In-kernel embedding gather: per-row dynamic sublane-slice loads from the
    # VMEM-resident tables, driven by SMEM scalar reads (unrolled, batch is a
    # trace-time constant).  Row-major flatten of the stacked (h over r) image
    # equals concat(e_h, e_r), so x rows are just [e_h | e_r].
    for i in range(batch):
        hi = h_ids[i]
        ri = r_ids[i]
        ti = t_ids[i]
        x_scr[pl.ds(i, 1), pl.ds(0, k)] = ent_ref[pl.ds(hi, 1), :]
        x_scr[pl.ds(i, 1), pl.ds(k, k)] = rel_ref[pl.ds(ri, 1), :]
        et_scr[pl.ds(i, 1), pl.ds(0, k)] = ent_ref[pl.ds(ti, 1), :]

    # "Conv" (im2col pre-folded into w1) — MXU, bf16 operands, f32 accumulation.
    x = x_scr[...].astype(jnp.bfloat16)                           # (M, 64)
    h1 = jnp.dot(x, w1_ref[...], preferred_element_type=jnp.float32)
    h1 = jnp.maximum(h1 + b1_ref[...], 0.0)                       # (M, 896) f32

    # FC projection — lane-dense 128-wide MXU matmul (padded cols are zero).
    proj = jnp.dot(h1.astype(jnp.bfloat16), w2_ref[...],
                   preferred_element_type=jnp.float32)
    proj = jnp.maximum(proj + b2_ref[...], 0.0)                   # (M, 128) f32

    # Score: lane-dense per-row dot with (zero-padded) tail embedding, then
    # sigmoid as exp on the EUP + approx reciprocal on the EUP.
    s = jnp.sum(proj * et_scr[...], axis=-1, keepdims=True)       # (M, 1) f32
    sig = pl.reciprocal(1.0 + jnp.exp(-s), approx=True)
    # Lane-dense store: full (M, 128) rows -> unmasked vst.
    o_ref[...] = jnp.broadcast_to(sig, o_ref.shape).astype(o_ref.dtype)


def fused_conve_forward(h, r, t, ent_emb, rel_emb, w1_bf16, b1_f32,
                        w2_bf16, b2_f32):
    """Single pallas_call covering gather + conv + FC + score + sigmoid."""
    B = h.shape[0]
    M = max(_TM, ((B + _TM - 1) // _TM) * _TM)   # sublane-aligned padded batch
    NE, K = ent_emb.shape
    NR = rel_emb.shape[0]
    HW, N1 = w1_bf16.shape                       # (64, 896)

    # TODO(synk): for large batches, tile M over a "parallel" (or CORE_PARALLEL)
    # grid axis with >=2 tiles so v7x's second TensorCore gets work; at B=2 a
    # single grid step is optimal (amortises the ~0.35 us per-step overhead).
    out = pl.pallas_call(
        functools.partial(_fused_conve_kernel, B),
        out_shape=jax.ShapeDtypeStruct((M, _OUT_LANES), jnp.float32),
        grid_spec=pltpu.PrefetchScalarGridSpec(
            num_scalar_prefetch=3,               # h, r, t id vectors -> SMEM
            grid=(1,),
            in_specs=[
                pl.BlockSpec((NE, K), lambda i, *_: (0, 0)),          # ent table
                pl.BlockSpec((NR, K), lambda i, *_: (0, 0)),          # rel table
                pl.BlockSpec((HW, N1), lambda i, *_: (0, 0)),         # w1
                pl.BlockSpec((1, N1), lambda i, *_: (0, 0)),          # b1
                pl.BlockSpec((N1, _OUT_LANES), lambda i, *_: (0, 0)), # w2 (padded)
                pl.BlockSpec((1, _OUT_LANES), lambda i, *_: (0, 0)),  # b2 (padded)
            ],
            out_specs=pl.BlockSpec((M, _OUT_LANES), lambda i, *_: (0, 0)),
            scratch_shapes=[
                pltpu.VMEM((M, HW), jnp.float32),          # x rows
                pltpu.VMEM((M, _OUT_LANES), jnp.float32),  # e_t rows (padded)
            ],
        ),
        compiler_params=pltpu.CompilerParams(
            dimension_semantics=("arbitrary",),
        ),
    )(h.astype(jnp.int32), r.astype(jnp.int32), t.astype(jnp.int32),
      ent_emb, rel_emb, w1_bf16, b1_f32, w2_bf16, b2_f32)
    return out[:B, 0]                                     # (B,)


# ----------------------------- init-time helpers -----------------------------

def _fold_conv_to_dense(w_conv, H, W, kh, kw, filters):
    """Fold (im2col + valid stride-1 conv) into one dense (H*W, P*filters) matrix.

    conv_out[b, p, f] = sum_{i,j} img[b, y+i, x+j] * w_conv[i*kw+j, f] is linear
    in the row-major-flattened image, so it equals flat_img @ dense with
    patch-major column layout p*filters + f (the order the FC weight expects).
    Done once at __init__ (host-side numpy), not per forward.
    # TODO(synk): for larger images the fold is ~86% structural zeros — switch
    # back to a patch-tiled matmul if H*W / (kh*kw) grows.
    """
    Ho, Wo = H - kh + 1, W - kw + 1
    w_np = np.asarray(w_conv, dtype=np.float32)                # (kh*kw, F)
    dense = np.zeros((H * W, Ho * Wo * filters), np.float32)
    for y in range(Ho):
        for x in range(Wo):
            p = y * Wo + x
            for i in range(kh):
                for j in range(kw):
                    m = (y + i) * W + (x + j)
                    dense[m, p * filters:(p + 1) * filters] = w_np[i * kw + j]
    return jnp.asarray(dense)


def _im2col(x, kh, kw):
    """Reference-only helper: (B, C, H, W) -> (B, Ho*Wo, C*kh*kw), valid conv."""
    B, C, H, W = x.shape
    Ho, Wo = H - kh + 1, W - kw + 1
    cols = []
    for c in range(C):
        for i in range(kh):
            for j in range(kw):
                cols.append(x[:, c, i:i + Ho, j:j + Wo])
    patches = jnp.stack(cols, axis=-1)
    return patches.reshape(B, Ho * Wo, C * kh * kw)


# ------------------------- concrete ProjectionModel ------------------------

class ProjectionModelConvE:
    """Concrete ConvE-style instantiation of the abstract ProjectionModel."""

    def __init__(self, model_name="ConvE", num_ent=16, num_rel=8,
                 k=32, emb_h=8, emb_w=4, filters=32, kernel=3, seed=0):
        assert emb_h * emb_w == k
        self.model_name = model_name
        self.database = {}
        self.k, self.emb_h, self.emb_w = k, emb_h, emb_w
        self.filters, self.kernel = filters, kernel
        self.img_h, self.img_w = 2 * emb_h, emb_w

        key = jax.random.PRNGKey(seed)
        k_e, k_r, k_c, k_f, k_bc, k_bf = jax.random.split(key, 6)

        # embedding tables
        self.ent_emb = 0.1 * jax.random.normal(k_e, (num_ent, k), jnp.float32)
        self.rel_emb = 0.1 * jax.random.normal(k_r, (num_rel, k), jnp.float32)

        # conv weight laid out for im2col matmul: (C*KH*KW, F); biases seeded
        # NONZERO so validation exercises the bias tiling/broadcast layout.
        self.w_conv = 0.1 * jax.random.normal(k_c, (kernel * kernel, filters),
                                              jnp.float32)
        self.b_conv = 0.1 * jax.random.normal(k_bc, (filters,), jnp.float32)

        # FC: flattened conv activation (patch-major) -> k
        ho = self.img_h - kernel + 1
        wo = self.img_w - kernel + 1
        self.n_patches = ho * wo
        self.w_fc = 0.1 * jax.random.normal(k_f, (self.n_patches * filters, k),
                                            jnp.float32)
        self.b_fc = 0.1 * jax.random.normal(k_bf, (k,), jnp.float32)

        # ---- one-time folding / padding / casting for the fused kernel ----
        self._w1_bf16 = _fold_conv_to_dense(
            self.w_conv, self.img_h, self.img_w, kernel, kernel, filters
        ).astype(jnp.bfloat16)                                    # (64, 896)
        self._b1_f32 = jnp.tile(self.b_conv, self.n_patches).reshape(1, -1)

        # FC weight/bias zero-padded K=32 -> 128 lanes (numerically identical,
        # makes the second matmul + score reduce fully lane-dense).
        w2_pad = jnp.zeros((self.n_patches * filters, _OUT_LANES), jnp.float32)
        w2_pad = w2_pad.at[:, :k].set(self.w_fc)
        self._w2_bf16 = w2_pad.astype(jnp.bfloat16)               # (896, 128)
        self._b2_f32 = jnp.zeros((1, _OUT_LANES), jnp.float32).at[0, :k].set(
            self.b_fc)

    def load_params(self, param_list, kwargs):
        for param_name in param_list:
            if param_name not in kwargs:
                raise Exception('hyperparameter %s not found!' % param_name)
            self.database[param_name] = kwargs[param_name]
        return self.database

    def embed(self, h, r, t):
        # Used only by the pure-JAX reference path; the fused kernel performs
        # its own in-kernel gather from the VMEM-resident tables.
        return (jnp.take(self.ent_emb, h, axis=0),
                jnp.take(self.rel_emb, r, axis=0),
                jnp.take(self.ent_emb, t, axis=0))

    def forward(self, h, r, t):
        # Everything (gather, stack, pad, conv, FC, score, sigmoid) happens in
        # the single fused pallas_call; the wrapper only slices the padded
        # lane-dense output slab back to (B,).
        return fused_conve_forward(h, r, t, self.ent_emb, self.rel_emb,
                                   self._w1_bf16, self._b1_f32,
                                   self._w2_bf16, self._b2_f32)

    # pure-JAX f32 reference (original im2col formulation) for validation
    def reference_forward(self, h, r, t):
        e_h, e_r, e_t = self.embed(h, r, t)
        B = e_h.shape[0]
        img = jnp.concatenate(
            [e_h.reshape(B, 1, self.emb_h, self.emb_w),
             e_r.reshape(B, 1, self.emb_h, self.emb_w)], axis=2)   # (B,1,2EH,EW)
        patches = _im2col(img, self.kernel, self.kernel)           # (B, P, 9)
        P = patches.shape[1]
        conv = jnp.maximum(
            patches.reshape(B * P, -1) @ self.w_conv + self.b_conv, 0.0)
        flat = conv.reshape(B, P * self.filters)
        proj = jnp.maximum(flat @ self.w_fc + self.b_fc, 0.0)
        return jax.nn.sigmoid(jnp.sum(proj * e_t, axis=-1))


# --------------------------------- main ------------------------------------

if __name__ == "__main__":
    model = ProjectionModelConvE(num_ent=16, num_rel=8, k=32,
                                 emb_h=8, emb_w=4, filters=32, seed=0)

    key = jax.random.PRNGKey(0)
    kh, kr, kt = jax.random.split(key, 3)
    B = 2
    h = jax.random.randint(kh, (B,), 0, 16, dtype=jnp.int32)
    r = jax.random.randint(kr, (B,), 0, 8, dtype=jnp.int32)
    t = jax.random.randint(kt, (B,), 0, 16, dtype=jnp.int32)

    out = jax.jit(model.forward)(h, r, t)
    out = jax.block_until_ready(out)
    assert out.shape == (B,)
    assert bool(jnp.all(jnp.isfinite(out)))

    # validate the fused / folded / padded kernel against the plain-JAX
    # im2col reference (bf16 MXU operands -> 2e-2 tolerance)
    ref = model.reference_forward(h, r, t)
    assert jnp.allclose(out, ref, atol=2e-2, rtol=2e-2), (out, ref)

    print("KERNEL_OK")
</pallas_src>

<mosaic_0001>
module attributes {stable_mosaic.version = 11 : i64} {
  func.func @_fused_conve_kernel(%arg0: i32, %arg1: memref<2xi32, #tpu.memory_space<smem>>, %arg2: memref<2xi32, #tpu.memory_space<smem>>, %arg3: memref<2xi32, #tpu.memory_space<smem>>, %arg4: memref<16x32xf32, #tpu.memory_space<vmem>>, %arg5: memref<8x32xf32, #tpu.memory_space<vmem>>, %arg6: memref<64x896xbf16, #tpu.memory_space<vmem>>, %arg7: memref<1x896xf32, #tpu.memory_space<vmem>>, %arg8: memref<896x128xbf16, #tpu.memory_space<vmem>>, %arg9: memref<1x128xf32, #tpu.memory_space<vmem>>, %arg10: memref<16x128xf32, #tpu.memory_space<vmem>>, %arg11: memref<16x64xf32, #tpu.memory_space<vmem>>, %arg12: memref<16x128xf32, #tpu.memory_space<vmem>>) attributes {dimension_semantics = [#tpu.dimension_semantics<arbitrary>], iteration_bounds = array<i64: 1>, scalar_prefetch = 3 : i64, scratch_operands = 2 : i64, tpu.core_type = #tpu.core_type<tc>, window_params = [{pipeline_mode = #tpu.pipeline_mode<synchronous>, transform_indices = @transform_0, window_bounds = array<i64: 16, 32>}, {pipeline_mode = #tpu.pipeline_mode<synchronous>, transform_indices = @transform_1, window_bounds = array<i64: 8, 32>}, {pipeline_mode = #tpu.pipeline_mode<synchronous>, transform_indices = @transform_2, window_bounds = array<i64: 64, 896>}, {pipeline_mode = #tpu.pipeline_mode<synchronous>, transform_indices = @transform_3, window_bounds = array<i64: 1, 896>}, {pipeline_mode = #tpu.pipeline_mode<synchronous>, transform_indices = @transform_4, window_bounds = array<i64: 896, 128>}, {pipeline_mode = #tpu.pipeline_mode<synchronous>, transform_indices = @transform_5, window_bounds = array<i64: 1, 128>}, {pipeline_mode = #tpu.pipeline_mode<synchronous>, transform_indices = @transform_6, window_bounds = array<i64: 16, 128>}]} {
    %cst = arith.constant 0.000000e+00 : f32
    %0 = vector.broadcast %cst : f32 to vector<16x64xf32>
    %c0 = arith.constant 0 : index
    %c0_0 = arith.constant 0 : index
    %1 = vector.load %arg11[%c0, %c0_0] : memref<16x64xf32, #tpu.memory_space<vmem>>, vector<16x64xf32>
    tpu.vector_store %arg11[%c0, %c0_0], %0 {strides = array<i32>} : memref<16x64xf32, #tpu.memory_space<vmem>>, vector<16x64xf32>,
    %cst_1 = arith.constant 0.000000e+00 : f32
    %2 = vector.broadcast %cst_1 : f32 to vector<16x128xf32>
    %c0_2 = arith.constant 0 : index
    %c0_3 = arith.constant 0 : index
    %3 = vector.load %arg12[%c0_2, %c0_3] : memref<16x128xf32, #tpu.memory_space<vmem>>, vector<16x128xf32>
    tpu.vector_store %arg12[%c0_2, %c0_3], %2 {strides = array<i32>} : memref<16x128xf32, #tpu.memory_space<vmem>>, vector<16x128xf32>,
    %c0_4 = arith.constant 0 : index
    %4 = memref.load %arg1[%c0_4] : memref<2xi32, #tpu.memory_space<smem>>
    %c0_5 = arith.constant 0 : index
    %5 = memref.load %arg2[%c0_5] : memref<2xi32, #tpu.memory_space<smem>>
    %c0_6 = arith.constant 0 : index
    %6 = memref.load %arg3[%c0_6] : memref<2xi32, #tpu.memory_space<smem>>
    %7 = arith.index_cast %4 : i32 to index
    %c0_7 = arith.constant 0 : index
    %8 = vector.load %arg4[%7, %c0_7] : memref<16x32xf32, #tpu.memory_space<vmem>>, vector<1x32xf32>
    %c0_8 = arith.constant 0 : index
    %c0_9 = arith.constant 0 : index
    %9 = vector.load %arg11[%c0_8, %c0_9] : memref<16x64xf32, #tpu.memory_space<vmem>>, vector<1x32xf32>
    tpu.vector_store %arg11[%c0_8, %c0_9], %8 {strides = array<i32>} : memref<16x64xf32, #tpu.memory_space<vmem>>, vector<1x32xf32>,
    %10 = arith.index_cast %5 : i32 to index
    %c0_10 = arith.constant 0 : index
    %11 = vector.load %arg5[%10, %c0_10] : memref<8x32xf32, #tpu.memory_space<vmem>>, vector<1x32xf32>
    %c0_11 = arith.constant 0 : index
    %c32 = arith.constant 32 : index
    %12 = vector.load %arg11[%c0_11, %c32] : memref<16x64xf32, #tpu.memory_space<vmem>>, vector<1x32xf32>
    tpu.vector_store %arg11[%c0_11, %c32], %11 {strides = array<i32>} : memref<16x64xf32, #tpu.memory_space<vmem>>, vector<1x32xf32>,
    %13 = arith.index_cast %6 : i32 to index
    %c0_12 = arith.constant 0 : index
    %14 = vector.load %arg4[%13, %c0_12] : memref<16x32xf32, #tpu.memory_space<vmem>>, vector<1x32xf32>
    %c0_13 = arith.constant 0 : index
    %c0_14 = arith.constant 0 : index
    %15 = vector.load %arg12[%c0_13, %c0_14] : memref<16x128xf32, #tpu.memory_space<vmem>>, vector<1x32xf32>
    tpu.vector_store %arg12[%c0_13, %c0_14], %14 {strides = array<i32>} : memref<16x128xf32, #tpu.memory_space<vmem>>, vector<1x32xf32>,
    %c1 = arith.constant 1 : index
    %16 = memref.load %arg1[%c1] : memref<2xi32, #tpu.memory_space<smem>>
    %c1_15 = arith.constant 1 : index
    %17 = memref.load %arg2[%c1_15] : memref<2xi32, #tpu.memory_space<smem>>
    %c1_16 = arith.constant 1 : index
    %18 = memref.load %arg3[%c1_16] : memref<2xi32, #tpu.memory_space<smem>>
    %19 = arith.index_cast %16 : i32 to index
    %c0_17 = arith.constant 0 : index
    %20 = vector.load %arg4[%19, %c0_17] : memref<16x32xf32, #tpu.memory_space<vmem>>, vector<1x32xf32>
    %c1_18 = arith.constant 1 : index
    %c0_19 = arith.constant 0 : index
    %21 = vector.load %arg11[%c1_18, %c0_19] : memref<16x64xf32, #tpu.memory_space<vmem>>, vector<1x32xf32>
    tpu.vector_store %arg11[%c1_18, %c0_19], %20 {strides = array<i32>} : memref<16x64xf32, #tpu.memory_space<vmem>>, vector<1x32xf32>,
    %22 = arith.index_cast %17 : i32 to index
    %c0_20 = arith.constant 0 : index
    %23 = vector.load %arg5[%22, %c0_20] : memref<8x32xf32, #tpu.memory_space<vmem>>, vector<1x32xf32>
    %c1_21 = arith.constant 1 : index
    %c32_22 = arith.constant 32 : index
    %24 = vector.load %arg11[%c1_21, %c32_22] : memref<16x64xf32, #tpu.memory_space<vmem>>, vector<1x32xf32>
    tpu.vector_store %arg11[%c1_21, %c32_22], %23 {strides = array<i32>} : memref<16x64xf32, #tpu.memory_space<vmem>>, vector<1x32xf32>,
    %25 = arith.index_cast %18 : i32 to index
    %c0_23 = arith.constant 0 : index
    %26 = vector.load %arg4[%25, %c0_23] : memref<16x32xf32, #tpu.memory_space<vmem>>, vector<1x32xf32>
    %c1_24 = arith.constant 1 : index
    %c0_25 = arith.constant 0 : index
    %27 = vector.load %arg12[%c1_24, %c0_25] : memref<16x128xf32, #tpu.memory_space<vmem>>, vector<1x32xf32>
    tpu.vector_store %arg12[%c1_24, %c0_25], %26 {strides = array<i32>} : memref<16x128xf32, #tpu.memory_space<vmem>>, vector<1x32xf32>,
    %c0_26 = arith.constant 0 : index
    %c0_27 = arith.constant 0 : index
    %28 = vector.load %arg11[%c0_26, %c0_27] : memref<16x64xf32, #tpu.memory_space<vmem>>, vector<16x64xf32>
    %29 = arith.truncf %28 : vector<16x64xf32> to vector<16x64xbf16>
    %c0_28 = arith.constant 0 : index
    %c0_29 = arith.constant 0 : index
    %30 = vector.load %arg6[%c0_28, %c0_29] : memref<64x896xbf16, #tpu.memory_space<vmem>>, vector<64x896xbf16>
    %cst_30 = arith.constant dense<0.000000e+00> : vector<16x896xf32>
    %31 = tpu.matmul %29, %30, %cst_30 {dimension_numbers = #tpu.dot_dimension_numbers<[1], [0], [0], [1], [0, 0, 1, 1], [], []>} : vector<16x64xbf16>, vector<64x896xbf16>, vector<16x896xf32> -> vector<16x896xf32>
    %c0_31 = arith.constant 0 : index
    %c0_32 = arith.constant 0 : index
    %32 = vector.load %arg7[%c0_31, %c0_32] : memref<1x896xf32, #tpu.memory_space<vmem>>, vector<1x896xf32>
    %33 = vector.broadcast %32 : vector<1x896xf32> to vector<16x896xf32>
    %34 = arith.addf %31, %33 : vector<16x896xf32>
    %cst_33 = arith.constant 0.000000e+00 : f32
    %35 = vector.broadcast %cst_33 : f32 to vector<16x896xf32>
    %36 = arith.maximumf %34, %35 : vector<16x896xf32>
    %37 = arith.truncf %36 : vector<16x896xf32> to vector<16x896xbf16>
    %c0_34 = arith.constant 0 : index
    %c0_35 = arith.constant 0 : index
    %38 = vector.load %arg8[%c0_34, %c0_35] : memref<896x128xbf16, #tpu.memory_space<vmem>>, vector<896x128xbf16>
    %cst_36 = arith.constant dense<0.000000e+00> : vector<16x128xf32>
    %39 = tpu.matmul %37, %38, %cst_36 {dimension_numbers = #tpu.dot_dimension_numbers<[1], [0], [0], [1], [0, 0, 1, 1], [], []>} : vector<16x896xbf16>, vector<896x128xbf16>, vector<16x128xf32> -> vector<16x128xf32>
    %c0_37 = arith.constant 0 : index
    %c0_38 = arith.constant 0 : index
    %40 = vector.load %arg9[%c0_37, %c0_38] : memref<1x128xf32, #tpu.memory_space<vmem>>, vector<1x128xf32>
    %41 = vector.broadcast %40 : vector<1x128xf32> to vector<16x128xf32>
    %42 = arith.addf %39, %41 : vector<16x128xf32>
    %cst_39 = arith.constant 0.000000e+00 : f32
    %43 = vector.broadcast %cst_39 : f32 to vector<16x128xf32>
    %44 = arith.maximumf %42, %43 : vector<16x128xf32>
    %c0_40 = arith.constant 0 : index
    %c0_41 = arith.constant 0 : index
    %45 = vector.load %arg12[%c0_40, %c0_41] : memref<16x128xf32, #tpu.memory_space<vmem>>, vector<16x128xf32>
    %46 = arith.mulf %44, %45 : vector<16x128xf32>
    %cst_42 = arith.constant dense<0.000000e+00> : vector<16xf32>
    %47 = vector.multi_reduction <add>, %46, %cst_42 [1] : vector<16x128xf32> to vector<16xf32>
    %48 = vector.shape_cast %47 : vector<16xf32> to vector<16x1xf32>
    %cst_43 = arith.constant 0.000000e+00 : f32
    %49 = vector.broadcast %cst_43 : f32 to vector<16x1xf32>
    %50 = arith.subf %49, %48 : vector<16x1xf32>
    %51 = math.exp %50 : vector<16x1xf32>
    %cst_44 = arith.constant 1.000000e+00 : f32
    %52 = vector.broadcast %cst_44 : f32 to vector<16x1xf32>
    %53 = arith.addf %52, %51 : vector<16x1xf32>
    %54 = tpu.reciprocal %53 {approx = true} : vector<16x1xf32> -> vector<16x1xf32>
    %55 = vector.shape_cast %54 : vector<16x1xf32> to vector<16x1xf32>
    %56 = vector.broadcast %55 : vector<16x1xf32> to vector<16x128xf32>
    %c0_45 = arith.constant 0 : index
    %c0_46 = arith.constant 0 : index
    %57 = vector.load %arg10[%c0_45, %c0_46] : memref<16x128xf32, #tpu.memory_space<vmem>>, vector<16x128xf32>
    tpu.vector_store %arg10[%c0_45, %c0_46], %56 {strides = array<i32>} : memref<16x128xf32, #tpu.memory_space<vmem>>, vector<16x128xf32>,
    return
  }
  func.func @transform_0(%arg0: i32, %arg1: memref<2xi32, #tpu.memory_space<smem>>, %arg2: memref<2xi32, #tpu.memory_space<smem>>, %arg3: memref<2xi32, #tpu.memory_space<smem>>) -> (i32, i32) {
    %c0_i32 = arith.constant 0 : i32
    %c0_i32_0 = arith.constant 0 : i32
    %c0_i32_1 = arith.constant 0 : i32
    return %c0_i32, %c0_i32_0 : i32, i32
  }
  func.func @transform_1(%arg0: i32, %arg1: memref<2xi32, #tpu.memory_space<smem>>, %arg2: memref<2xi32, #tpu.memory_space<smem>>, %arg3: memref<2xi32, #tpu.memory_space<smem>>) -> (i32, i32) {
    %c0_i32 = arith.constant 0 : i32
    %c0_i32_0 = arith.constant 0 : i32
    %c0_i32_1 = arith.constant 0 : i32
    return %c0_i32, %c0_i32_0 : i32, i32
  }
  func.func @transform_2(%arg0: i32, %arg1: memref<2xi32, #tpu.memory_space<smem>>, %arg2: memref<2xi32, #tpu.memory_space<smem>>, %arg3: memref<2xi32, #tpu.memory_space<smem>>) -> (i32, i32) {
    %c0_i32 = arith.constant 0 : i32
    %c0_i32_0 = arith.constant 0 : i32
    %c0_i32_1 = arith.constant 0 : i32
    return %c0_i32, %c0_i32_0 : i32, i32
  }
  func.func @transform_3(%arg0: i32, %arg1: memref<2xi32, #tpu.memory_space<smem>>, %arg2: memref<2xi32, #tpu.memory_space<smem>>, %arg3: memref<2xi32, #tpu.memory_space<smem>>) -> (i32, i32) {
    %c0_i32 = arith.constant 0 : i32
    %c0_i32_0 = arith.constant 0 : i32
    %c0_i32_1 = arith.constant 0 : i32
    return %c0_i32, %c0_i32_0 : i32, i32
  }
  func.func @transform_4(%arg0: i32, %arg1: memref<2xi32, #tpu.memory_space<smem>>, %arg2: memref<2xi32, #tpu.memory_space<smem>>, %arg3: memref<2xi32, #tpu.memory_space<smem>>) -> (i32, i32) {
    %c0_i32 = arith.constant 0 : i32
    %c0_i32_0 = arith.constant 0 : i32
    %c0_i32_1 = arith.constant 0 : i32
    return %c0_i32, %c0_i32_0 : i32, i32
  }
  func.func @transform_5(%arg0: i32, %arg1: memref<2xi32, #tpu.memory_space<smem>>, %arg2: memref<2xi32, #tpu.memory_space<smem>>, %arg3: memref<2xi32, #tpu.memory_space<smem>>) -> (i32, i32) {
    %c0_i32 = arith.constant 0 : i32
    %c0_i32_0 = arith.constant 0 : i32
    %c0_i32_1 = arith.constant 0 : i32
    return %c0_i32, %c0_i32_0 : i32, i32
  }
  func.func @transform_6(%arg0: i32, %arg1: memref<2xi32, #tpu.memory_space<smem>>, %arg2: memref<2xi32, #tpu.memory_space<smem>>, %arg3: memref<2xi32, #tpu.memory_space<smem>>) -> (i32, i32) {
    %c0_i32 = arith.constant 0 : i32
    %c0_i32_0 = arith.constant 0 : i32
    %c0_i32_1 = arith.constant 0 : i32
    return %c0_i32, %c0_i32_0 : i32, i32
  }
}

</mosaic_0001>

<llo_original>
// kernel: forward.1
$region0: #{forward.1}
  #allocation0 [shape = 'u32[]', space=smem, size = 0x4, offset = 0x4, fixed_abs, tag = 'smem constant byte address 0x4 - core index']
  #allocation1 [shape = 'u32[144,128]{1,0:T(1,128)}', space=vmem, size = 0x12000, scoped, tag = 'internal scratch']
  #allocation2 [shape = 'f32[16,64]{1,0:T(8,128)}', space=vmem, size = 0x2000, scoped, tag = 'scratch operand']
  #allocation3 [shape = 'f32[16,128]{1,0:T(8,128)}', space=vmem, size = 0x2000, scoped, tag = 'scratch operand']
  #allocation4 [shape = 's32[1]{0}', space=sflag, size = 0x4, scoped, tag = 'scoped memory for forward.1']
  #allocation5 [shape = 'u8[512]{0}', space=smem, size = 0x200, scoped, tag = 'prefetched SMEM operand 0']
  #allocation6 [shape = 'u8[512]{0}', space=smem, size = 0x200, scoped, tag = 'prefetched SMEM operand 1']
  #allocation7 [shape = 'u8[512]{0}', space=smem, size = 0x200, scoped, tag = 'prefetched SMEM operand 2']
  %s0 = inlined_call_operand.vmem [shape: s32[2], index: 0, kind: input, shape index: {}]
  %s1 = inlined_call_operand.vmem [shape: s32[2], index: 1, kind: input, shape index: {}]
  %s2 = inlined_call_operand.vmem [shape: s32[2], index: 2, kind: input, shape index: {}]
  %s3 = inlined_call_operand.vmem [shape: f32[16,32], index: 3, kind: input, shape index: {}]
  %s4 = inlined_call_operand.vmem [shape: f32[8,32], index: 4, kind: input, shape index: {}]
  %s5 = inlined_call_operand.vmem [shape: bf16[64,896], index: 5, kind: input, shape index: {}]
  %s6 = inlined_call_operand.vmem [shape: f32[1,896], index: 6, kind: input, shape index: {}]
  %s7 = inlined_call_operand.vmem [shape: bf16[896,128], index: 7, kind: input, shape index: {}]
  %s8 = inlined_call_operand.hbm [shape: f32[1,128], index: 8, kind: input, shape index: {}]
  %s9 = inlined_call_operand.vmem [shape: f32[16,128], index: 9, kind: output, shape index: {}]
  %s10 = sld [smem:[#allocation0]]
  $region38: #{forward.1} parent=0
    _
  %s12 = ssub.s32 1, %s10
  %s13 = scalar_select 0, %s12, %s10
  %s14 = sshll.u32 %s0, 4
  %s15 = int_to_ptr.vmem [resolvable:$true] %s14
  %17 = dma.vmem_to_smem %s15, 16, [#allocation5], [#allocation4]
  %s18 = sshll.u32 %s1, 4
  %s19 = int_to_ptr.vmem [resolvable:$true] %s18
  %21 = dma.vmem_to_smem %s19, 16, [#allocation6], [#allocation4]
  %s22 = sshll.u32 %s2, 4
  %s23 = int_to_ptr.vmem [resolvable:$true] %s22
  %25 = dma.vmem_to_smem %s23, 16, [#allocation7], [#allocation4]
  %26 = dma.done [#allocation4], 48
  %27 = sfence
  $region1: #{forward.1} parent=0
    #allocation8 [shape = 'u8[512]{0}', space=vmem, size = 0x400, scoped, tag = 'input window, operand 8, single buffered']
    #allocation9 [shape = 's32[1]{0}', space=sflag, size = 0x4, scoped, tag = 'scoped memory for forward.1']
    %28 = vsyncpa [#allocation9], 0
    // Predicated region
    $region2: #{forward.1} parent=1 // pred_check
      _
    $region3: #{forward.1} parent=1 // pred_check_branch
      %30 = sbr.rel (0) target = $region5
    $region4: #{forward.1} parent=1 // pred_region
      _
    $region5: #{forward.1} parent=1 // pred_fallthru
      _
    // Predicated region
    $region6: #{forward.1} parent=1 // pred_check
      _
    $region7: #{forward.1} parent=1 // pred_check_branch
      %32 = sbr.rel (0) target = $region9
    $region8: #{forward.1} parent=1 // pred_region
      _
    $region9: #{forward.1} parent=1 // pred_fallthru
      _
    // Predicated region
    $region10: #{forward.1} parent=1 // pred_check
      _
    $region11: #{forward.1} parent=1 // pred_check_branch
      %34 = sbr.rel (0) target = $region13
    $region12: #{forward.1} parent=1 // pred_region
      _
    $region13: #{forward.1} parent=1 // pred_fallthru
      _
    // Predicated region
    $region14: #{forward.1} parent=1 // pred_check
      _
    $region15: #{forward.1} parent=1 // pred_check_branch
      %36 = sbr.rel (0) target = $region17
    $region16: #{forward.1} parent=1 // pred_region
      _
    $region17: #{forward.1} parent=1 // pred_fallthru
      _
    // Predicated region
    $region18: #{forward.1} parent=1 // pred_check
      _
    $region19: #{forward.1} parent=1 // pred_check_branch
      %38 = sbr.rel (0) target = $region21
    $region20: #{forward.1} parent=1 // pred_region
      _
    $region21: #{forward.1} parent=1 // pred_fallthru
      _
    // Predicated region
    $region22: #{forward.1} parent=1 // pred_check
      _
    $region23: #{forward.1} parent=1 // pred_check_branch
      %40 = sbr.rel (0) target = $region25
    $region24: #{forward.1} parent=1 // pred_region
      %s42 = ssub.s32 16, 16
      %43 = vsyncadd [#allocation9], %s42
      %s45 = sshll.u32 [#allocation8], 4
      %s46 = int_to_ptr.vmem [resolvable:$true] %s45
      %48 = dma.hbm_to_vmem [thread:$0]  %s8, 16, %s46, [#allocation9]
    $region25: #{forward.1} parent=1 // pred_fallthru
      _
    // Predicated region
    $region26: #{forward.1} parent=1 // pred_check
      _
    $region27: #{forward.1} parent=1 // pred_check_branch
      %50 = sbr.rel (0) target = $region29
    $region28: #{forward.1} parent=1 // pred_region
      %51 = dma.done [#allocation9], 16
    $region29: #{forward.1} parent=1 // pred_fallthru
      _
    %vm53 = vcmask 523264
    %54 = vst.msk [vmem:[#allocation2] sm:$0xff] %vm53, 0.0
    %55 = vst.msk [vmem:[#allocation2 + $0x8] sm:$0xff] %vm53, 0.0
    %56 = vst [vmem:[#allocation3] sm:$0xff] 0.0
    %57 = vst [vmem:[#allocation3 + $0x8] sm:$0xff] 0.0
    %s58 = sld [smem:[#allocation5]]
    %s59 = sld [smem:[#allocation6]]
    %s60 = sld [smem:[#allocation7]]
    %s61 = scalar_lea.vmem %s3, %s58
    %v62 = vld [vmem:[%s61] sm:$0x1]
    %vm63 = vcmask 253952
    %64 = vst.msk [vmem:[#allocation2] sm:$0x1] %vm63, %v62
    %s65 = scalar_lea.vmem %s4, %s59
    %v66 = vld [vmem:[%s65] sm:$0x1]
    %68 = vrot.lane.b32.xlu0 %v66, 32
    %v69 = vpop.permute.xlu0 %68
    %vm71 = vcmask 516352
    %72 = vst.msk [vmem:[#allocation2] sm:$0x1] %vm71, %v69
    %s73 = scalar_lea.vmem %s3, %s60
    %v74 = vld [vmem:[%s73] sm:$0x1]
    %75 = vst.msk [vmem:[#allocation3] sm:$0x1] %vm63, %v74
    %s76 = sld [smem:[#allocation5 + $0x1]]
    %s77 = sld [smem:[#allocation6 + $0x1]]
    %s78 = sld [smem:[#allocation7 + $0x1]]
    %s79 = scalar_lea.vmem %s3, %s76
    %v80 = vld [vmem:[%s79] sm:$0x1]
    %81 = vst.msk [vmem:[#allocation2 + $0x1] sm:$0x1] %vm63, %v80
    %s82 = scalar_lea.vmem %s4, %s77
    %v83 = vld [vmem:[%s82] sm:$0x1]
    %85 = vrot.lane.b32.xlu0 %v83, 32
    %v86 = vpop.permute.xlu0 %85
    %88 = vst.msk [vmem:[#allocation2 + $0x1] sm:$0x1] %vm71, %v86
    %s89 = scalar_lea.vmem %s3, %s78
    %v90 = vld [vmem:[%s89] sm:$0x1]
    %91 = vst.msk [vmem:[#allocation3 + $0x1] sm:$0x1] %vm63, %v90
    %v92 = vld [vmem:[#allocation2] sm:$0xff]
    %v93 = vld [vmem:[#allocation2 + $0x8] sm:$0xff]
    %v94 = vpack.c.bf16 %v93, %v92
    %v95 = vld [vmem:[%s5] sm:$0xff]
    %v96 = vld [vmem:[%s5 + $0x8] sm:$0xff]
    %v97 = vld [vmem:[%s5 + $0x10] sm:$0xff]
    %v98 = vld [vmem:[%s5 + $0x18] sm:$0xf]
    %v99 = vld [vmem:[%s5 + $0x1c] sm:$0xff]
    %v100 = vld [vmem:[%s5 + $0x24] sm:$0xff]
    %v101 = vld [vmem:[%s5 + $0x2c] sm:$0xff]
    %v102 = vld [vmem:[%s5 + $0x34] sm:$0xf]
    %v103 = vld [vmem:[%s5 + $0x38] sm:$0xff]
    %v104 = vld [vmem:[%s5 + $0x40] sm:$0xff]
    %v105 = vld [vmem:[%s5 + $0x48] sm:$0xff]
    %v106 = vld [vmem:[%s5 + $0x50] sm:$0xf]
    %v107 = vld [vmem:[%s5 + $0x54] sm:$0xff]
    %v108 = vld [vmem:[%s5 + $0x5c] sm:$0xff]
    %v109 = vld [vmem:[%s5 + $0x64] sm:$0xff]
    %v110 = vld [vmem:[%s5 + $0x6c] sm:$0xf]
    %v111 = vld [vmem:[%s5 + $0x70] sm:$0xff]
    %v112 = vld [vmem:[%s5 + $0x78] sm:$0xff]
    %v113 = vld [vmem:[%s5 + $0x80] sm:$0xff]
    %v114 = vld [vmem:[%s5 + $0x88] sm:$0xf]
    %v115 = vld [vmem:[%s5 + $0x8c] sm:$0xff]
    %v116 = vld [vmem:[%s5 + $0x94] sm:$0xff]
    %v117 = vld [vmem:[%s5 + $0x9c] sm:$0xff]
    %v118 = vld [vmem:[%s5 + $0xa4] sm:$0xf]
    %v119 = vld [vmem:[%s5 + $0xa8] sm:$0xff]
    %v120 = vld [vmem:[%s5 + $0xb0] sm:$0xff]
    %v121 = vld [vmem:[%s5 + $0xb8] sm:$0xff]
    %v122 = vld [vmem:[%s5 + $0xc0] sm:$0xf]
    %v123 = vld [vmem:[%s5 + $0xc4] sm:$0xff]
    %v124 = vld [vmem:[%s5 + $0xcc] sm:$0xff]
    %v125 = vld [vmem:[%s5 + $0xd4] sm:$0xff]
    %v126 = vld [vmem:[%s5 + $0xdc] sm:$0xf]
    %v127 = vld [vmem:[%s6] sm:$0xff]
    %v129 = vlaneseq
    %v130 = vshrl.u32 %v129, 7
    %v131 = vsub.s32 0, %v130
    %v132 = vrot.slane %v127, %v131
    %v133 = vlaneseq
    %v134 = vshrl.u32 %v133, 7
    %v135 = vsub.s32 1, %v134
    %v136 = vrot.slane %v127, %v135
    %v137 = vlaneseq
    %v138 = vshrl.u32 %v137, 7
    %v139 = vsub.s32 2, %v138
    %v140 = vrot.slane %v127, %v139
    %v141 = vlaneseq
    %v142 = vshrl.u32 %v141, 7
    %v143 = vsub.s32 3, %v142
    %v144 = vrot.slane %v127, %v143
    %v145 = vlaneseq
    %v146 = vshrl.u32 %v145, 7
    %v147 = vsub.s32 4, %v146
    %v148 = vrot.slane %v127, %v147
    %v149 = vlaneseq
    %v150 = vshrl.u32 %v149, 7
    %v151 = vsub.s32 5, %v150
    %v152 = vrot.slane %v127, %v151
    %v153 = vlaneseq
    %v154 = vshrl.u32 %v153, 7
    %v155 = vsub.s32 6, %v154
    %v156 = vrot.slane %v127, %v155
    %v196 = vunpack.c.l.b16 %v95
    %v197 = vunpack.c.h.b16 %v95
    %v198 = vunpack.c.l.b16 %v96
    %v199 = vunpack.c.h.b16 %v96
    %v200 = vunpack.c.l.b16 %v97
    %v201 = vunpack.c.h.b16 %v97
    %v202 = vunpack.c.l.b16 %v98
    %v203 = vunpack.c.l.b16 %v99
    %v204 = vunpack.c.h.b16 %v99
    %v205 = vunpack.c.l.b16 %v100
    %v206 = vunpack.c.h.b16 %v100
    %v207 = vunpack.c.l.b16 %v101
    %v208 = vunpack.c.h.b16 %v101
    %v209 = vunpack.c.l.b16 %v102
    %v210 = vunpack.c.l.b16 %v103
    %v211 = vunpack.c.h.b16 %v103
    %v212 = vunpack.c.l.b16 %v104
    %v213 = vunpack.c.h.b16 %v104
    %v214 = vunpack.c.l.b16 %v105
    %v215 = vunpack.c.h.b16 %v105
    %v216 = vunpack.c.l.b16 %v106
    %v217 = vunpack.c.l.b16 %v107
    %v218 = vunpack.c.h.b16 %v107
    %v219 = vunpack.c.l.b16 %v108
    %v220 = vunpack.c.h.b16 %v108
    %v221 = vunpack.c.l.b16 %v109
    %v222 = vunpack.c.h.b16 %v109
    %v223 = vunpack.c.l.b16 %v110
    %v224 = vunpack.c.l.b16 %v111
    %v225 = vunpack.c.h.b16 %v111
    %v226 = vunpack.c.l.b16 %v112
    %v227 = vunpack.c.h.b16 %v112
    %v228 = vunpack.c.l.b16 %v113
    %v229 = vunpack.c.h.b16 %v113
    %v230 = vunpack.c.l.b16 %v114
    %v231 = vunpack.c.l.b16 %v115
    %v232 = vunpack.c.h.b16 %v115
    %v233 = vunpack.c.l.b16 %v116
    %v234 = vunpack.c.h.b16 %v116
    %v235 = vunpack.c.l.b16 %v117
    %v236 = vunpack.c.h.b16 %v117
    %v237 = vunpack.c.l.b16 %v118
    %v238 = vunpack.c.l.b16 %v119
    %v239 = vunpack.c.h.b16 %v119
    %v240 = vunpack.c.l.b16 %v120
    %v241 = vunpack.c.h.b16 %v120
    %v242 = vunpack.c.l.b16 %v121
    %v243 = vunpack.c.h.b16 %v121
    %v244 = vunpack.c.l.b16 %v122
    %v245 = vunpack.c.l.b16 %v123
    %v246 = vunpack.c.h.b16 %v123
    %v247 = vunpack.c.l.b16 %v124
    %v248 = vunpack.c.h.b16 %v124
    %v249 = vunpack.c.l.b16 %v125
    %v250 = vunpack.c.h.b16 %v125
    %v251 = vunpack.c.l.b16 %v126
    %v252 = vpack.c.b16 %v203, %v196
    %v253 = vpack.c.b16 %v204, %v197
    %v254 = vpack.c.b16 %v205, %v198
    %v255 = vpack.c.b16 %v206, %v199
    %v256 = vpack.c.b16 %v207, %v200
    %v257 = vpack.c.b16 %v208, %v201
    %v258 = vpack.c.b16 %v209, %v202
    %v259 = vpack.c.b16 %v217, %v210
    %v260 = vpack.c.b16 %v218, %v211
    %v261 = vpack.c.b16 %v219, %v212
    %v262 = vpack.c.b16 %v220, %v213
    %v263 = vpack.c.b16 %v221, %v214
    %v264 = vpack.c.b16 %v222, %v215
    %v265 = vpack.c.b16 %v223, %v216
    %v266 = vpack.c.b16 %v231, %v224
    %v267 = vpack.c.b16 %v232, %v225
    %v268 = vpack.c.b16 %v233, %v226
    %v269 = vpack.c.b16 %v234, %v227
    %v270 = vpack.c.b16 %v235, %v228
    %v271 = vpack.c.b16 %v236, %v229
    %v272 = vpack.c.b16 %v237, %v230
    %v273 = vpack.c.b16 %v245, %v238
    %v274 = vpack.c.b16 %v246, %v239
    %v275 = vpack.c.b16 %v247, %v240
    %v276 = vpack.c.b16 %v248, %v241
    %v277 = vpack.c.b16 %v249, %v242
    %v278 = vpack.c.b16 %v250, %v243
    %v279 = vpack.c.b16 %v251, %v244
    %v309 = vsel %vm53, %v94, 0
    %311 = vmatprep.subr.bf16.mxu0 %v253
    %312 = vmatpush1.bf16.msra.mxu0 %v252
    %313 = vmatprep.subr.bf16.mxu0 %v260
    %314 = vmatpush1.bf16.msra.mxu0 %v259
    %315 = vmatprep.subr.bf16.mxu0 %v267
    %316 = vmatpush1.bf16.msra.mxu0 %v266
    %317 = vmatprep.subr.bf16.mxu0 %v274
    %318 = vmatpush1.bf16.msra.mxu0 %v273
    %319 = vmatprep.subr.bf16.mxu0 0
    %320 = vmatpush1.bf16.msra.mxu0 0
    %321 = vmatprep.subr.bf16.mxu0 0
    %322 = vmatpush1.bf16.msra.mxu0 0
    %323 = vmatprep.subr.bf16.mxu0 0
    %324 = vmatpush1.bf16.msra.mxu0 0
    %325 = vmatprep.subr.bf16.mxu0 0
    %326 = vmatpush1.bf16.msra.mxu0 0
    %327 = vmatprep.subr.bf16.mxu0 0
    %328 = vmatpush1.bf16.msra.mxu0 0
    %329 = vmatprep.subr.bf16.mxu0 0
    %330 = vmatpush1.bf16.msra.mxu0 0
    %331 = vmatprep.subr.bf16.mxu0 0
    %332 = vmatpush1.bf16.msra.mxu0 0
    %333 = vmatprep.subr.bf16.mxu0 0
    %334 = vmatpush1.bf16.msra.mxu0 0
    %335 = vmatprep.subr.bf16.mxu0 0
    %336 = vmatpush1.bf16.msra.mxu0 0
    %337 = vmatprep.subr.bf16.mxu0 0
    %338 = vmatpush1.bf16.msra.mxu0 0
    %339 = vmatprep.subr.bf16.mxu0 0
    %340 = vmatpush1.bf16.msra.mxu0 0
    %341 = vmatprep.subr.bf16.mxu0 0
    %342 = vmatpush1.bf16.msra.mxu0 0
    %343 = vmatprep.mubr.bf16.mxu0 0
    %344 = vmatmul.mubr.bf16.gmra.mrb[0].mxu0 %v309
    %v345 = vpop.f32.mrb[0].mxu0
    %v346 = vadd.f32 %v132, %v345
    %v347 = vpop.f32.mrb[0].mxu0
    %v348 = vadd.f32 %v136, %v347
    %v349 = vpop.f32.mrb[0].mxu0
    %v350 = vadd.f32 %v132, %v349
    %v351 = vpop.f32.mrb[0].mxu0
    %v352 = vadd.f32 %v136, %v351
    %353 = vdwg.mxu0
    %354 = vmatprep.subr.bf16.mxu0 %v255
    %355 = vmatpush1.bf16.msra.mxu0 %v254
    %356 = vmatprep.subr.bf16.mxu0 %v262
    %357 = vmatpush1.bf16.msra.mxu0 %v261
    %358 = vmatprep.subr.bf16.mxu0 %v269
    %359 = vmatpush1.bf16.msra.mxu0 %v268
    %360 = vmatprep.subr.bf16.mxu0 %v276
    %361 = vmatpush1.bf16.msra.mxu0 %v275
    %362 = vmatprep.subr.bf16.mxu0 0
    %363 = vmatpush1.bf16.msra.mxu0 0
    %364 = vmatprep.subr.bf16.mxu0 0
    %365 = vmatpush1.bf16.msra.mxu0 0
    %366 = vmatprep.subr.bf16.mxu0 0
    %367 = vmatpush1.bf16.msra.mxu0 0
    %368 = vmatprep.subr.bf16.mxu0 0
    %369 = vmatpush1.bf16.msra.mxu0 0
    %370 = vmatprep.subr.bf16.mxu0 0
    %371 = vmatpush1.bf16.msra.mxu0 0
    %372 = vmatprep.subr.bf16.mxu0 0
    %373 = vmatpush1.bf16.msra.mxu0 0
    %374 = vmatprep.subr.bf16.mxu0 0
    %375 = vmatpush1.bf16.msra.mxu0 0
    %376 = vmatprep.subr.bf16.mxu0 0
    %377 = vmatpush1.bf16.msra.mxu0 0
    %378 = vmatprep.subr.bf16.mxu0 0
    %379 = vmatpush1.bf16.msra.mxu0 0
    %380 = vmatprep.subr.bf16.mxu0 0
    %381 = vmatpush1.bf16.msra.mxu0 0
    %382 = vmatprep.subr.bf16.mxu0 0
    %383 = vmatpush1.bf16.msra.mxu0 0
    %384 = vmatprep.subr.bf16.mxu0 0
    %385 = vmatpush1.bf16.msra.mxu0 0
    %386 = vmatprep.mubr.bf16.mxu0 0
    %387 = vmatmul.mubr.bf16.gmra.mrb[0].mxu0 %v309
    %v388 = vpop.f32.mrb[0].mxu0
    %v389 = vadd.f32 %v140, %v388
    %v390 = vpop.f32.mrb[0].mxu0
    %v391 = vadd.f32 %v144, %v390
    %v392 = vpop.f32.mrb[0].mxu0
    %v393 = vadd.f32 %v140, %v392
    %v394 = vpop.f32.mrb[0].mxu0
    %v395 = vadd.f32 %v144, %v394
    %396 = vdwg.mxu0
    %397 = vmatprep.subr.bf16.mxu0 %v257
    %398 = vmatpush1.bf16.msra.mxu0 %v256
    %399 = vmatprep.subr.bf16.mxu0 %v264
    %400 = vmatpush1.bf16.msra.mxu0 %v263
    %401 = vmatprep.subr.bf16.mxu0 %v271
    %402 = vmatpush1.bf16.msra.mxu0 %v270
    %403 = vmatprep.subr.bf16.mxu0 %v278
    %404 = vmatpush1.bf16.msra.mxu0 %v277
    %405 = vmatprep.subr.bf16.mxu0 0
    %406 = vmatpush1.bf16.msra.mxu0 0
    %407 = vmatprep.subr.bf16.mxu0 0
    %408 = vmatpush1.bf16.msra.mxu0 0
    %409 = vmatprep.subr.bf16.mxu0 0
    %410 = vmatpush1.bf16.msra.mxu0 0
    %411 = vmatprep.subr.bf16.mxu0 0
    %412 = vmatpush1.bf16.msra.mxu0 0
    %413 = vmatprep.subr.bf16.mxu0 0
    %414 = vmatpush1.bf16.msra.mxu0 0
    %415 = vmatprep.subr.bf16.mxu0 0
    %416 = vmatpush1.bf16.msra.mxu0 0
    %417 = vmatprep.subr.bf16.mxu0 0
    %418 = vmatpush1.bf16.msra.mxu0 0
    %419 = vmatprep.subr.bf16.mxu0 0
    %420 = vmatpush1.bf16.msra.mxu0 0
    %421 = vmatprep.subr.bf16.mxu0 0
    %422 = vmatpush1.bf16.msra.mxu0 0
    %423 = vmatprep.subr.bf16.mxu0 0
    %424 = vmatpush1.bf16.msra.mxu0 0
    %425 = vmatprep.subr.bf16.mxu0 0
    %426 = vmatpush1.bf16.msra.mxu0 0
    %427 = vmatprep.subr.bf16.mxu0 0
    %428 = vmatpush1.bf16.msra.mxu0 0
    %429 = vmatprep.mubr.bf16.mxu0 0
    %430 = vmatmul.mubr.bf16.gmra.mrb[0].mxu0 %v309
    %v431 = vpop.f32.mrb[0].mxu0
    %v432 = vadd.f32 %v148, %v431
    %v433 = vpop.f32.mrb[0].mxu0
    %v434 = vadd.f32 %v152, %v433
    %v435 = vpop.f32.mrb[0].mxu0
    %v436 = vadd.f32 %v148, %v435
    %v437 = vpop.f32.mrb[0].mxu0
    %v438 = vadd.f32 %v152, %v437
    %439 = vdwg.mxu0
    %440 = vmatprep.subr.bf16.mxu0 0
    %441 = vmatpush1.bf16.msra.mxu0 %v258
    %442 = vmatprep.subr.bf16.mxu0 0
    %443 = vmatpush1.bf16.msra.mxu0 %v265
    %444 = vmatprep.subr.bf16.mxu0 0
    %445 = vmatpush1.bf16.msra.mxu0 %v272
    %446 = vmatprep.subr.bf16.mxu0 0
    %447 = vmatpush1.bf16.msra.mxu0 %v279
    %448 = vmatprep.subr.bf16.mxu0 0
    %449 = vmatpush1.bf16.msra.mxu0 0
    %450 = vmatprep.subr.bf16.mxu0 0
    %451 = vmatpush1.bf16.msra.mxu0 0
    %452 = vmatprep.subr.bf16.mxu0 0
    %453 = vmatpush1.bf16.msra.mxu0 0
    %454 = vmatprep.subr.bf16.mxu0 0
    %455 = vmatpush1.bf16.msra.mxu0 0
    %456 = vmatprep.subr.bf16.mxu0 0
    %457 = vmatpush1.bf16.msra.mxu0 0
    %458 = vmatprep.subr.bf16.mxu0 0
    %459 = vmatpush1.bf16.msra.mxu0 0
    %460 = vmatprep.subr.bf16.mxu0 0
    %461 = vmatpush1.bf16.msra.mxu0 0
    %462 = vmatprep.subr.bf16.mxu0 0
    %463 = vmatpush1.bf16.msra.mxu0 0
    %464 = vmatprep.subr.bf16.mxu0 0
    %465 = vmatpush1.bf16.msra.mxu0 0
    %466 = vmatprep.subr.bf16.mxu0 0
    %467 = vmatpush1.bf16.msra.mxu0 0
    %468 = vmatprep.subr.bf16.mxu0 0
    %469 = vmatpush1.bf16.msra.mxu0 0
    %470 = vmatprep.subr.bf16.mxu0 0
    %471 = vmatpush1.bf16.msra.mxu0 0
    %472 = vmatprep.mubr.bf16.mxu0 0
    %473 = vmatmul.mubr.bf16.gmra.mrb[0].mxu0 %v309
    %v474 = vpop.f32.mrb[0].mxu0
    %v475 = vadd.f32 %v156, %v474
    %v476 = vpop.f32.mrb[0].mxu0
    %v477 = vpop.f32.mrb[0].mxu0
    %v478 = vadd.f32 %v156, %v477
    %v479 = vpop.f32.mrb[0].mxu0
    %480 = vdwg.mxu0
    %v481 = vmax.f32 %v346, 0.0
    %v482 = vmax.f32 %v348, 0.0
    %v483 = vmax.f32 %v389, 0.0
    %v484 = vmax.f32 %v391, 0.0
    %v485 = vmax.f32 %v432, 0.0
    %v486 = vmax.f32 %v434, 0.0
    %v487 = vmax.f32 %v475, 0.0
    %v488 = vmax.f32 %v350, 0.0
    %v489 = vmax.f32 %v352, 0.0
    %v490 = vmax.f32 %v393, 0.0
    %v491 = vmax.f32 %v395, 0.0
    %v492 = vmax.f32 %v436, 0.0
    %v493 = vmax.f32 %v438, 0.0
    %v494 = vmax.f32 %v478, 0.0
    %v495 = vpack.c.bf16 %v488, %v481
    %v496 = vpack.c.bf16 %v489, %v482
    %v497 = vpack.c.bf16 %v490, %v483
    %v498 = vpack.c.bf16 %v491, %v484
    %v499 = vpack.c.bf16 %v492, %v485
    %v500 = vpack.c.bf16 %v493, %v486
    %v501 = vpack.c.bf16 %v494, %v487
    %v502 = vld [vmem:[%s7] sm:$0xf]
    %v503 = vld [vmem:[%s7 + $0x4] sm:$0xf]
    %v504 = vld [vmem:[%s7 + $0x8] sm:$0xf]
    %v505 = vld [vmem:[%s7 + $0xc] sm:$0xf]
    %v506 = vld [vmem:[%s7 + $0x10] sm:$0xf]
    %v507 = vld [vmem:[%s7 + $0x14] sm:$0xf]
    %v508 = vld [vmem:[%s7 + $0x18] sm:$0xf]
    %v509 = vld [vmem:[%s7 + $0x1c] sm:$0xf]
    %v510 = vld [vmem:[%s7 + $0x20] sm:$0xf]
    %v511 = vld [vmem:[%s7 + $0x24] sm:$0xf]
    %v512 = vld [vmem:[%s7 + $0x28] sm:$0xf]
    %v513 = vld [vmem:[%s7 + $0x2c] sm:$0xf]
    %v514 = vld [vmem:[%s7 + $0x30] sm:$0xf]
    %v515 = vld [vmem:[%s7 + $0x34] sm:$0xf]
    %v516 = vld [vmem:[%s7 + $0x38] sm:$0xf]
    %v517 = vld [vmem:[%s7 + $0x3c] sm:$0xf]
    %v518 = vld [vmem:[%s7 + $0x40] sm:$0xf]
    %v519 = vld [vmem:[%s7 + $0x44] sm:$0xf]
    %v520 = vld [vmem:[%s7 + $0x48] sm:$0xf]
    %v521 = vld [vmem:[%s7 + $0x4c] sm:$0xf]
    %v522 = vld [vmem:[%s7 + $0x50] sm:$0xf]
    %v523 = vld [vmem:[%s7 + $0x54] sm:$0xf]
    %v524 = vld [vmem:[%s7 + $0x58] sm:$0xf]
    %v525 = vld [vmem:[%s7 + $0x5c] sm:$0xf]
    %v526 = vld [vmem:[%s7 + $0x60] sm:$0xf]
    %v527 = vld [vmem:[%s7 + $0x64] sm:$0xf]
    %v528 = vld [vmem:[%s7 + $0x68] sm:$0xf]
    %v529 = vld [vmem:[%s7 + $0x6c] sm:$0xf]
    %v530 = vld [vmem:[%s7 + $0x70] sm:$0xf]
    %v531 = vld [vmem:[%s7 + $0x74] sm:$0xf]
    %v532 = vld [vmem:[%s7 + $0x78] sm:$0xf]
    %v533 = vld [vmem:[%s7 + $0x7c] sm:$0xf]
    %v534 = vld [vmem:[%s7 + $0x80] sm:$0xf]
    %v535 = vld [vmem:[%s7 + $0x84] sm:$0xf]
    %v536 = vld [vmem:[%s7 + $0x88] sm:$0xf]
    %v537 = vld [vmem:[%s7 + $0x8c] sm:$0xf]
    %v538 = vld [vmem:[%s7 + $0x90] sm:$0xf]
    %v539 = vld [vmem:[%s7 + $0x94] sm:$0xf]
    %v540 = vld [vmem:[%s7 + $0x98] sm:$0xf]
    %v541 = vld [vmem:[%s7 + $0x9c] sm:$0xf]
    %v542 = vld [vmem:[%s7 + $0xa0] sm:$0xf]
    %v543 = vld [vmem:[%s7 + $0xa4] sm:$0xf]
    %v544 = vld [vmem:[%s7 + $0xa8] sm:$0xf]
    %v545 = vld [vmem:[%s7 + $0xac] sm:$0xf]
    %v546 = vld [vmem:[%s7 + $0xb0] sm:$0xf]
    %v547 = vld [vmem:[%s7 + $0xb4] sm:$0xf]
    %v548 = vld [vmem:[%s7 + $0xb8] sm:$0xf]
    %v549 = vld [vmem:[%s7 + $0xbc] sm:$0xf]
    %v550 = vld [vmem:[%s7 + $0xc0] sm:$0xf]
    %v551 = vld [vmem:[%s7 + $0xc4] sm:$0xf]
    %v552 = vld [vmem:[%s7 + $0xc8] sm:$0xf]
    %v553 = vld [vmem:[%s7 + $0xcc] sm:$0xf]
    %v554 = vld [vmem:[%s7 + $0xd0] sm:$0xf]
    %v555 = vld [vmem:[%s7 + $0xd4] sm:$0xf]
    %v556 = vld [vmem:[%s7 + $0xd8] sm:$0xf]
    %v557 = vld [vmem:[%s7 + $0xdc] sm:$0xf]
    %v558 = vld [vmem:[%s7 + $0xe0] sm:$0xf]
    %v559 = vld [vmem:[%s7 + $0xe4] sm:$0xf]
    %v560 = vld [vmem:[%s7 + $0xe8] sm:$0xf]
    %v561 = vld [vmem:[%s7 + $0xec] sm:$0xf]
    %v562 = vld [vmem:[%s7 + $0xf0] sm:$0xf]
    %v563 = vld [vmem:[%s7 + $0xf4] sm:$0xf]
    %v564 = vld [vmem:[%s7 + $0xf8] sm:$0xf]
    %v565 = vld [vmem:[%s7 + $0xfc] sm:$0xf]
    %v566 = vld [vmem:[%s7 + $0x100] sm:$0xf]
    %v567 = vld [vmem:[%s7 + $0x104] sm:$0xf]
    %v568 = vld [vmem:[%s7 + $0x108] sm:$0xf]
    %v569 = vld [vmem:[%s7 + $0x10c] sm:$0xf]
    %v570 = vld [vmem:[%s7 + $0x110] sm:$0xf]
    %v571 = vld [vmem:[%s7 + $0x114] sm:$0xf]
    %v572 = vld [vmem:[%s7 + $0x118] sm:$0xf]
    %v573 = vld [vmem:[%s7 + $0x11c] sm:$0xf]
    %v574 = vld [vmem:[%s7 + $0x120] sm:$0xf]
    %v575 = vld [vmem:[%s7 + $0x124] sm:$0xf]
    %v576 = vld [vmem:[%s7 + $0x128] sm:$0xf]
    %v577 = vld [vmem:[%s7 + $0x12c] sm:$0xf]
    %v578 = vld [vmem:[%s7 + $0x130] sm:$0xf]
    %v579 = vld [vmem:[%s7 + $0x134] sm:$0xf]
    %v580 = vld [vmem:[%s7 + $0x138] sm:$0xf]
    %v581 = vld [vmem:[%s7 + $0x13c] sm:$0xf]
    %v582 = vld [vmem:[%s7 + $0x140] sm:$0xf]
    %v583 = vld [vmem:[%s7 + $0x144] sm:$0xf]
    %v584 = vld [vmem:[%s7 + $0x148] sm:$0xf]
    %v585 = vld [vmem:[%s7 + $0x14c] sm:$0xf]
    %v586 = vld [vmem:[%s7 + $0x150] sm:$0xf]
    %v587 = vld [vmem:[%s7 + $0x154] sm:$0xf]
    %v588 = vld [vmem:[%s7 + $0x158] sm:$0xf]
    %v589 = vld [vmem:[%s7 + $0x15c] sm:$0xf]
    %v590 = vld [vmem:[%s7 + $0x160] sm:$0xf]
    %v591 = vld [vmem:[%s7 + $0x164] sm:$0xf]
    %v592 = vld [vmem:[%s7 + $0x168] sm:$0xf]
    %v593 = vld [vmem:[%s7 + $0x16c] sm:$0xf]
    %v594 = vld [vmem:[%s7 + $0x170] sm:$0xf]
    %v595 = vld [vmem:[%s7 + $0x174] sm:$0xf]
    %v596 = vld [vmem:[%s7 + $0x178] sm:$0xf]
    %v597 = vld [vmem:[%s7 + $0x17c] sm:$0xf]
    %v598 = vld [vmem:[%s7 + $0x180] sm:$0xf]
    %v599 = vld [vmem:[%s7 + $0x184] sm:$0xf]
    %v600 = vld [vmem:[%s7 + $0x188] sm:$0xf]
    %v601 = vld [vmem:[%s7 + $0x18c] sm:$0xf]
    %v602 = vld [vmem:[%s7 + $0x190] sm:$0xf]
    %v603 = vld [vmem:[%s7 + $0x194] sm:$0xf]
    %v604 = vld [vmem:[%s7 + $0x198] sm:$0xf]
    %v605 = vld [vmem:[%s7 + $0x19c] sm:$0xf]
    %v606 = vld [vmem:[%s7 + $0x1a0] sm:$0xf]
    %v607 = vld [vmem:[%s7 + $0x1a4] sm:$0xf]
    %v608 = vld [vmem:[%s7 + $0x1a8] sm:$0xf]
    %v609 = vld [vmem:[%s7 + $0x1ac] sm:$0xf]
    %v610 = vld [vmem:[%s7 + $0x1b0] sm:$0xf]
    %v611 = vld [vmem:[%s7 + $0x1b4] sm:$0xf]
    %v612 = vld [vmem:[%s7 + $0x1b8] sm:$0xf]
    %v613 = vld [vmem:[%s7 + $0x1bc] sm:$0xf]
    %v614 = vld [vmem:[#allocation8] sm:$0x1]
    %v616 = vlaneseq
    %v617 = vshrl.u32 %v616, 7
    %v618 = vsub.s32 0, %v617
    %v619 = vrot.slane %v614, %v618
    %v733 = vunpack.c.l.b16 %v502
    %v734 = vunpack.c.l.b16 %v503
    %v735 = vunpack.c.l.b16 %v504
    %v736 = vunpack.c.l.b16 %v505
    %v737 = vunpack.c.l.b16 %v506
    %v738 = vunpack.c.l.b16 %v507
    %v739 = vunpack.c.l.b16 %v508
    %v740 = vunpack.c.l.b16 %v509
    %v741 = vunpack.c.l.b16 %v510
    %v742 = vunpack.c.l.b16 %v511
    %v743 = vunpack.c.l.b16 %v512
    %v744 = vunpack.c.l.b16 %v513
    %v745 = vunpack.c.l.b16 %v514
    %v746 = vunpack.c.l.b16 %v515
    %v747 = vunpack.c.l.b16 %v516
    %v748 = vunpack.c.l.b16 %v517
    %v749 = vunpack.c.l.b16 %v518
    %v750 = vunpack.c.l.b16 %v519
    %v751 = vunpack.c.l.b16 %v520
    %v752 = vunpack.c.l.b16 %v521
    %v753 = vunpack.c.l.b16 %v522
    %v754 = vunpack.c.l.b16 %v523
    %v755 = vunpack.c.l.b16 %v524
    %v756 = vunpack.c.l.b16 %v525
    %v757 = vunpack.c.l.b16 %v526
    %v758 = vunpack.c.l.b16 %v527
    %v759 = vunpack.c.l.b16 %v528
    %v760 = vunpack.c.l.b16 %v529
    %v761 = vunpack.c.l.b16 %v530
    %v762 = vunpack.c.l.b16 %v531
    %v763 = vunpack.c.l.b16 %v532
    %v764 = vunpack.c.l.b16 %v533
    %v765 = vunpack.c.l.b16 %v534
    %v766 = vunpack.c.l.b16 %v535
    %v767 = vunpack.c.l.b16 %v536
    %v768 = vunpack.c.l.b16 %v537
    %v769 = vunpack.c.l.b16 %v538
    %v770 = vunpack.c.l.b16 %v539
    %v771 = vunpack.c.l.b16 %v540
    %v772 = vunpack.c.l.b16 %v541
    %v773 = vunpack.c.l.b16 %v542
    %v774 = vunpack.c.l.b16 %v543
    %v775 = vunpack.c.l.b16 %v544
    %v776 = vunpack.c.l.b16 %v545
    %v777 = vunpack.c.l.b16 %v546
    %v778 = vunpack.c.l.b16 %v547
    %v779 = vunpack.c.l.b16 %v548
    %v780 = vunpack.c.l.b16 %v549
    %v781 = vunpack.c.l.b16 %v550
    %v782 = vunpack.c.l.b16 %v551
    %v783 = vunpack.c.l.b16 %v552
    %v784 = vunpack.c.l.b16 %v553
    %v785 = vunpack.c.l.b16 %v554
    %v786 = vunpack.c.l.b16 %v555
    %v787 = vunpack.c.l.b16 %v556
    %v788 = vunpack.c.l.b16 %v557
    %v789 = vunpack.c.l.b16 %v558
    %v790 = vunpack.c.l.b16 %v559
    %v791 = vunpack.c.l.b16 %v560
    %v792 = vunpack.c.l.b16 %v561
    %v793 = vunpack.c.l.b16 %v562
    %v794 = vunpack.c.l.b16 %v563
    %v795 = vunpack.c.l.b16 %v564
    %v796 = vunpack.c.l.b16 %v565
    %v797 = vunpack.c.l.b16 %v566
    %v798 = vunpack.c.l.b16 %v567
    %v799 = vunpack.c.l.b16 %v568
    %v800 = vunpack.c.l.b16 %v569
    %v801 = vunpack.c.l.b16 %v570
    %v802 = vunpack.c.l.b16 %v571
    %v803 = vunpack.c.l.b16 %v572
    %v804 = vunpack.c.l.b16 %v573
    %v805 = vunpack.c.l.b16 %v574
    %v806 = vunpack.c.l.b16 %v575
    %v807 = vunpack.c.l.b16 %v576
    %v808 = vunpack.c.l.b16 %v577
    %v809 = vunpack.c.l.b16 %v578
    %v810 = vunpack.c.l.b16 %v579
    %v811 = vunpack.c.l.b16 %v580
    %v812 = vunpack.c.l.b16 %v581
    %v813 = vunpack.c.l.b16 %v582
    %v814 = vunpack.c.l.b16 %v583
    %v815 = vunpack.c.l.b16 %v584
    %v816 = vunpack.c.l.b16 %v585
    %v817 = vunpack.c.l.b16 %v586
    %v818 = vunpack.c.l.b16 %v587
    %v819 = vunpack.c.l.b16 %v588
    %v820 = vunpack.c.l.b16 %v589
    %v821 = vunpack.c.l.b16 %v590
    %v822 = vunpack.c.l.b16 %v591
    %v823 = vunpack.c.l.b16 %v592
    %v824 = vunpack.c.l.b16 %v593
    %v825 = vunpack.c.l.b16 %v594
    %v826 = vunpack.c.l.b16 %v595
    %v827 = vunpack.c.l.b16 %v596
    %v828 = vunpack.c.l.b16 %v597
    %v829 = vunpack.c.l.b16 %v598
    %v830 = vunpack.c.l.b16 %v599
    %v831 = vunpack.c.l.b16 %v600
    %v832 = vunpack.c.l.b16 %v601
    %v833 = vunpack.c.l.b16 %v602
    %v834 = vunpack.c.l.b16 %v603
    %v835 = vunpack.c.l.b16 %v604
    %v836 = vunpack.c.l.b16 %v605
    %v837 = vunpack.c.l.b16 %v606
    %v838 = vunpack.c.l.b16 %v607
    %v839 = vunpack.c.l.b16 %v608
    %v840 = vunpack.c.l.b16 %v609
    %v841 = vunpack.c.l.b16 %v610
    %v842 = vunpack.c.l.b16 %v611
    %v843 = vunpack.c.l.b16 %v612
    %v844 = vunpack.c.l.b16 %v613
    %v845 = vpack.c.b16 %v734, %v733
    %v846 = vpack.c.b16 %v736, %v735
    %v847 = vpack.c.b16 %v738, %v737
    %v848 = vpack.c.b16 %v740, %v739
    %v849 = vpack.c.b16 %v742, %v741
    %v850 = vpack.c.b16 %v744, %v743
    %v851 = vpack.c.b16 %v746, %v745
    %v852 = vpack.c.b16 %v748, %v747
    %v853 = vpack.c.b16 %v750, %v749
    %v854 = vpack.c.b16 %v752, %v751
    %v855 = vpack.c.b16 %v754, %v753
    %v856 = vpack.c.b16 %v756, %v755
    %v857 = vpack.c.b16 %v758, %v757
    %v858 = vpack.c.b16 %v760, %v759
    %v859 = vpack.c.b16 %v762, %v761
    %v860 = vpack.c.b16 %v764, %v763
    %v861 = vpack.c.b16 %v766, %v765
    %v862 = vpack.c.b16 %v768, %v767
    %v863 = vpack.c.b16 %v770, %v769
    %v864 = vpack.c.b16 %v772, %v771
    %v865 = vpack.c.b16 %v774, %v773
    %v866 = vpack.c.b16 %v776, %v775
    %v867 = vpack.c.b16 %v778, %v777
    %v868 = vpack.c.b16 %v780, %v779
    %v869 = vpack.c.b16 %v782, %v781
    %v870 = vpack.c.b16 %v784, %v783
    %v871 = vpack.c.b16 %v786, %v785
    %v872 = vpack.c.b16 %v788, %v787
    %v873 = vpack.c.b16 %v790, %v789
    %v874 = vpack.c.b16 %v792, %v791
    %v875 = vpack.c.b16 %v794, %v793
    %v876 = vpack.c.b16 %v796, %v795
    %v877 = vpack.c.b16 %v798, %v797
    %v878 = vpack.c.b16 %v800, %v799
    %v879 = vpack.c.b16 %v802, %v801
    %v880 = vpack.c.b16 %v804, %v803
    %v881 = vpack.c.b16 %v806, %v805
    %v882 = vpack.c.b16 %v808, %v807
    %v883 = vpack.c.b16 %v810, %v809
    %v884 = vpack.c.b16 %v812, %v811
    %v885 = vpack.c.b16 %v814, %v813
    %v886 = vpack.c.b16 %v816, %v815
    %v887 = vpack.c.b16 %v818, %v817
    %v888 = vpack.c.b16 %v820, %v819
    %v889 = vpack.c.b16 %v822, %v821
    %v890 = vpack.c.b16 %v824, %v823
    %v891 = vpack.c.b16 %v826, %v825
    %v892 = vpack.c.b16 %v828, %v827
    %v893 = vpack.c.b16 %v830, %v829
    %v894 = vpack.c.b16 %v832, %v831
    %v895 = vpack.c.b16 %v834, %v833
    %v896 = vpack.c.b16 %v836, %v835
    %v897 = vpack.c.b16 %v838, %v837
    %v898 = vpack.c.b16 %v840, %v839
    %v899 = vpack.c.b16 %v842, %v841
    %v900 = vpack.c.b16 %v844, %v843
    %957 = vmatprep.subr.bf16.mxu0 0
    %958 = vmatpush1.bf16.msra.mxu0 %v845
    %959 = vmatprep.subr.bf16.mxu0 0
    %960 = vmatpush1.bf16.msra.mxu0 %v846
    %961 = vmatprep.subr.bf16.mxu0 0
    %962 = vmatpush1.bf16.msra.mxu0 %v847
    %963 = vmatprep.subr.bf16.mxu0 0
    %964 = vmatpush1.bf16.msra.mxu0 %v848
    %965 = vmatprep.subr.bf16.mxu0 0
    %966 = vmatpush1.bf16.msra.mxu0 %v849
    %967 = vmatprep.subr.bf16.mxu0 0
    %968 = vmatpush1.bf16.msra.mxu0 %v850
    %969 = vmatprep.subr.bf16.mxu0 0
    %970 = vmatpush1.bf16.msra.mxu0 %v851
    %971 = vmatprep.subr.bf16.mxu0 0
    %972 = vmatpush1.bf16.msra.mxu0 %v852
    %973 = vmatprep.subr.bf16.mxu0 0
    %974 = vmatpush1.bf16.msra.mxu0 %v853
    %975 = vmatprep.subr.bf16.mxu0 0
    %976 = vmatpush1.bf16.msra.mxu0 %v854
    %977 = vmatprep.subr.bf16.mxu0 0
    %978 = vmatpush1.bf16.msra.mxu0 %v855
    %979 = vmatprep.subr.bf16.mxu0 0
    %980 = vmatpush1.bf16.msra.mxu0 %v856
    %981 = vmatprep.subr.bf16.mxu0 0
    %982 = vmatpush1.bf16.msra.mxu0 %v857
    %983 = vmatprep.subr.bf16.mxu0 0
    %984 = vmatpush1.bf16.msra.mxu0 %v858
    %985 = vmatprep.subr.bf16.mxu0 0
    %986 = vmatpush1.bf16.msra.mxu0 %v859
    %987 = vmatprep.subr.bf16.mxu0 0
    %988 = vmatpush1.bf16.msra.mxu0 %v860
    %989 = vmatprep.mubr.bf16.mxu0 %v496
    %990 = vmatmul.mubr.bf16.gmra.mrb[0].mxu0 %v495
    %v991 = vpop.f32.mrb[0].mxu0
    %v992 = vadd.f32 %v619, %v991
    %v993 = vpop.f32.mrb[0].mxu0
    %v994 = vpop.f32.mrb[0].mxu0
    %v995 = vadd.f32 %v619, %v994
    %v996 = vpop.f32.mrb[0].mxu0
    %997 = vdwg.mxu0
    %998 = vmatprep.subr.bf16.mxu0 0
    %999 = vmatpush1.bf16.msra.mxu0 %v861
    %1000 = vmatprep.subr.bf16.mxu0 0
    %1001 = vmatpush1.bf16.msra.mxu0 %v862
    %1002 = vmatprep.subr.bf16.mxu0 0
    %1003 = vmatpush1.bf16.msra.mxu0 %v863
    %1004 = vmatprep.subr.bf16.mxu0 0
    %1005 = vmatpush1.bf16.msra.mxu0 %v864
    %1006 = vmatprep.subr.bf16.mxu0 0
    %1007 = vmatpush1.bf16.msra.mxu0 %v865
    %1008 = vmatprep.subr.bf16.mxu0 0
    %1009 = vmatpush1.bf16.msra.mxu0 %v866
    %1010 = vmatprep.subr.bf16.mxu0 0
    %1011 = vmatpush1.bf16.msra.mxu0 %v867
    %1012 = vmatprep.subr.bf16.mxu0 0
    %1013 = vmatpush1.bf16.msra.mxu0 %v868
    %1014 = vmatprep.subr.bf16.mxu0 0
    %1015 = vmatpush1.bf16.msra.mxu0 %v869
    %1016 = vmatprep.subr.bf16.mxu0 0
    %1017 = vmatpush1.bf16.msra.mxu0 %v870
    %1018 = vmatprep.subr.bf16.mxu0 0
    %1019 = vmatpush1.bf16.msra.mxu0 %v871
    %1020 = vmatprep.subr.bf16.mxu0 0
    %1021 = vmatpush1.bf16.msra.mxu0 %v872
    %1022 = vmatprep.subr.bf16.mxu0 0
    %1023 = vmatpush1.bf16.msra.mxu0 %v873
    %1024 = vmatprep.subr.bf16.mxu0 0
    %1025 = vmatpush1.bf16.msra.mxu0 %v874
    %1026 = vmatprep.subr.bf16.mxu0 0
    %1027 = vmatpush1.bf16.msra.mxu0 %v875
    %1028 = vmatprep.subr.bf16.mxu0 0
    %1029 = vmatpush1.bf16.msra.mxu0 %v876
    %1030 = vmatprep.mubr.bf16.mxu0 %v498
    %1031 = vmatmul.mubr.bf16.gmra.mrb[0].mxu0 %v497
    %v1032 = vpop.f32.mrb[0].mxu0
    %v1033 = vadd.f32 %v992, %v1032
    %v1034 = vpop.f32.mrb[0].mxu0
    %v1035 = vpop.f32.mrb[0].mxu0
    %v1036 = vadd.f32 %v995, %v1035
    %v1037 = vpop.f32.mrb[0].mxu0
    %1038 = vdwg.mxu0
    %1039 = vmatprep.subr.bf16.mxu0 0
    %1040 = vmatpush1.bf16.msra.mxu0 %v877
    %1041 = vmatprep.subr.bf16.mxu0 0
    %1042 = vmatpush1.bf16.msra.mxu0 %v878
    %1043 = vmatprep.subr.bf16.mxu0 0
    %1044 = vmatpush1.bf16.msra.mxu0 %v879
    %1045 = vmatprep.subr.bf16.mxu0 0
    %1046 = vmatpush1.bf16.msra.mxu0 %v880
    %1047 = vmatprep.subr.bf16.mxu0 0
    %1048 = vmatpush1.bf16.msra.mxu0 %v881
    %1049 = vmatprep.subr.bf16.mxu0 0
    %1050 = vmatpush1.bf16.msra.mxu0 %v882
    %1051 = vmatprep.subr.bf16.mxu0 0
    %1052 = vmatpush1.bf16.msra.mxu0 %v883
    %1053 = vmatprep.subr.bf16.mxu0 0
    %1054 = vmatpush1.bf16.msra.mxu0 %v884
    %1055 = vmatprep.subr.bf16.mxu0 0
    %1056 = vmatpush1.bf16.msra.mxu0 %v885
    %1057 = vmatprep.subr.bf16.mxu0 0
    %1058 = vmatpush1.bf16.msra.mxu0 %v886
    %1059 = vmatprep.subr.bf16.mxu0 0
    %1060 = vmatpush1.bf16.msra.mxu0 %v887
    %1061 = vmatprep.subr.bf16.mxu0 0
    %1062 = vmatpush1.bf16.msra.mxu0 %v888
    %1063 = vmatprep.subr.bf16.mxu0 0
    %1064 = vmatpush1.bf16.msra.mxu0 %v889
    %1065 = vmatprep.subr.bf16.mxu0 0
    %1066 = vmatpush1.bf16.msra.mxu0 %v890
    %1067 = vmatprep.subr.bf16.mxu0 0
    %1068 = vmatpush1.bf16.msra.mxu0 %v891
    %1069 = vmatprep.subr.bf16.mxu0 0
    %1070 = vmatpush1.bf16.msra.mxu0 %v892
    %1071 = vmatprep.mubr.bf16.mxu0 %v500
    %1072 = vmatmul.mubr.bf16.gmra.mrb[0].mxu0 %v499
    %v1073 = vpop.f32.mrb[0].mxu0
    %v1074 = vadd.f32 %v1033, %v1073
    %v1075 = vpop.f32.mrb[0].mxu0
    %v1076 = vpop.f32.mrb[0].mxu0
    %v1077 = vadd.f32 %v1036, %v1076
    %v1078 = vpop.f32.mrb[0].mxu0
    %1079 = vdwg.mxu0
    %1080 = vmatprep.subr.bf16.mxu0 0
    %1081 = vmatpush1.bf16.msra.mxu0 %v893
    %1082 = vmatprep.subr.bf16.mxu0 0
    %1083 = vmatpush1.bf16.msra.mxu0 %v894
    %1084 = vmatprep.subr.bf16.mxu0 0
    %1085 = vmatpush1.bf16.msra.mxu0 %v895
    %1086 = vmatprep.subr.bf16.mxu0 0
    %1087 = vmatpush1.bf16.msra.mxu0 %v896
    %1088 = vmatprep.subr.bf16.mxu0 0
    %1089 = vmatpush1.bf16.msra.mxu0 %v897
    %1090 = vmatprep.subr.bf16.mxu0 0
    %1091 = vmatpush1.bf16.msra.mxu0 %v898
    %1092 = vmatprep.subr.bf16.mxu0 0
    %1093 = vmatpush1.bf16.msra.mxu0 %v899
    %1094 = vmatprep.subr.bf16.mxu0 0
    %1095 = vmatpush1.bf16.msra.mxu0 %v900
    %1096 = vmatprep.subr.bf16.mxu0 0
    %1097 = vmatpush1.bf16.msra.mxu0 0
    %1098 = vmatprep.subr.bf16.mxu0 0
    %1099 = vmatpush1.bf16.msra.mxu0 0
    %1100 = vmatprep.subr.bf16.mxu0 0
    %1101 = vmatpush1.bf16.msra.mxu0 0
    %1102 = vmatprep.subr.bf16.mxu0 0
    %1103 = vmatpush1.bf16.msra.mxu0 0
    %1104 = vmatprep.subr.bf16.mxu0 0
    %1105 = vmatpush1.bf16.msra.mxu0 0
    %1106 = vmatprep.subr.bf16.mxu0 0
    %1107 = vmatpush1.bf16.msra.mxu0 0
    %1108 = vmatprep.subr.bf16.mxu0 0
    %1109 = vmatpush1.bf16.msra.mxu0 0
    %1110 = vmatprep.subr.bf16.mxu0 0
    %1111 = vmatpush1.bf16.msra.mxu0 0
    %1112 = vmatprep.mubr.bf16.mxu0 0
    %1113 = vmatmul.mubr.bf16.gmra.mrb[0].mxu0 %v501
    %v1114 = vpop.f32.mrb[0].mxu0
    %v1115 = vadd.f32 %v1074, %v1114
    %v1116 = vpop.f32.mrb[0].mxu0
    %v1117 = vpop.f32.mrb[0].mxu0
    %v1118 = vadd.f32 %v1077, %v1117
    %v1119 = vpop.f32.mrb[0].mxu0
    %1120 = vdwg.mxu0
    %v1121 = vmax.f32 %v1115, 0.0
    %v1122 = vmax.f32 %v1118, 0.0
    %v1123 = vld [vmem:[#allocation3] sm:$0xff]
    %v1124 = vld [vmem:[#allocation3 + $0x8] sm:$0xff]
    %v1125 = vmul.f32 %v1121, %v1123
    %v1126 = vmul.f32 %v1122, %v1124
    %1127 = vadd.xlane.f32.xlu0 %v1125
    %v1128 = vpop.xlane.xlu0 %1127
    %1129 = vadd.xlane.f32.xlu0 %v1126
    %v1130 = vpop.xlane.xlu0 %1129
    %v1131 = vsub.f32 0.0, %v1128
    %v1132 = vsub.f32 0.0, %v1130
    %v1133 = vmul.f32 %v1131, 1.442695
    %v1134 = vpow.pop %v1133
    %v1135 = vmul.f32 %v1132, 1.442695
    %v1136 = vpow.pop %v1135
    %v1137 = vadd.f32 %v1134, 1.0
    %v1138 = vadd.f32 %v1136, 1.0
    %v1139 = vrcp.pop %v1137
    %v1140 = vrcp.pop %v1138
    %1141 = vst [vmem:[%s9] sm:$0xff] %v1139
    %1142 = vst [vmem:[%s9 + $0x8] sm:$0xff] %v1140
    // Predicated region
    $region30: #{forward.1} parent=1 // pred_check
      _
    $region31: #{forward.1} parent=1 // pred_check_branch
      %1144 = sbr.rel (0) target = $region33
    $region32: #{forward.1} parent=1 // pred_region
      _
    $region33: #{forward.1} parent=1 // pred_fallthru
      _
    // Predicated region
    $region34: #{forward.1} parent=1 // pred_check
      _
    $region35: #{forward.1} parent=1 // pred_check_branch
      %1146 = sbr.rel (0) target = $region37
    $region36: #{forward.1} parent=1 // pred_region
      _
    $region37: #{forward.1} parent=1 // pred_fallthru
      _
    %1147 = vsyncpa [#allocation9], 1

</llo_original>
